<compile_context>
chip_gen: v6e
topology: v6e:2x2x1
jax: 0.10.0
libtpu: 0.0.40
codegen_flags: <defaults>
</compile_context>

<pallas_src>
import jax
import jax.numpy as jnp
from jax.experimental import pallas as pl
from jax.experimental.pallas import tpu as pltpu


_MAX_TILE = 1024  # lane-dense DeepWalk output tile (4 MiB f32); fits all generations


def _round_up(x, m):
    return ((x + m - 1) // m) * m


def _choose_tile_and_pad(n, max_tile=_MAX_TILE):
    """Largest tile in {1024,512,256,128} whose padding overhead is <= ~12.5%."""
    n128 = _round_up(max(n, 1), 128)
    for tile in (1024, 512, 256, 128):
        if tile > max_tile:
            continue
        n_pad = _round_up(n128, tile)
        if n_pad * 8 <= n128 * 9:      # allow at most 12.5% extra rows
            return tile, n_pad
    return 128, n128


def _vmem_limit_bytes():
    """Per-generation scoped-VMEM budget (v7x: 64 MiB physical; v5e/v6e: 128 MiB)."""
    try:
        cap = pltpu.get_tpu_info().vmem_capacity_bytes
    except Exception:
        cap = 64 * 1024 * 1024
    return int(min(cap // 2, 64 * 1024 * 1024))


# ----------------------------------------------------------------------------
# Pallas kernel: DeepWalk matrix tile  M[i, j] = log(max(V_i . V_j, 1)).
# The vol/negative scale is pre-folded into V (sqrt per factor).
# V (n_pad, r_pad) and V^T (r_pad, n_pad) stay VMEM-resident; per grid step we slice
# a (tile, r_pad) row block and an (r_pad, tile) column block with pl.ds, run one
# MXU matmul (f32 accumulate) and an EUP log, and store a lane-dense (tile, tile) tile.
# ----------------------------------------------------------------------------
def _deepwalk_kernel(v_ref, vt_ref, m_ref):
    tile = m_ref.shape[0]
    row0 = pl.multiple_of(pl.program_id(0) * tile, tile)
    col0 = pl.multiple_of(pl.program_id(1) * tile, tile)
    vr = v_ref[pl.ds(row0, tile), :]            # (tile, r_pad)
    vc = vt_ref[:, pl.ds(col0, tile)]           # (r_pad, tile) -- pre-transposed, no vxpose
    prod = jax.lax.dot_general(vr, vc, (((1,), (0,)), ((), ())),
                               preferred_element_type=jnp.float32)
    m_ref[...] = jnp.log(jnp.maximum(prod, 1.0))


def deepwalk_matrix(v_pad, tile):
    n_pad, r_pad = v_pad.shape
    vt_pad = v_pad.T                            # one-time transpose in HBM
    grid = (n_pad // tile, n_pad // tile)
    return pl.pallas_call(
        _deepwalk_kernel,
        out_shape=jax.ShapeDtypeStruct((n_pad, n_pad), jnp.float32),
        grid_spec=pltpu.PrefetchScalarGridSpec(
            num_scalar_prefetch=0,
            grid=grid,
            in_specs=[pl.BlockSpec((n_pad, r_pad), lambda i, j: (0, 0)),   # resident V
                      pl.BlockSpec((r_pad, n_pad), lambda i, j: (0, 0))],  # resident V^T
            out_specs=pl.BlockSpec((tile, tile), lambda i, j: (i, j)),
        ),
        compiler_params=pltpu.CompilerParams(
            dimension_semantics=("parallel", "parallel"),
            vmem_limit_bytes=_vmem_limit_bytes()),
    )(v_pad, vt_pad)


# ----------------------------------------------------------------------------
# NetMF module (forward pass)
# ----------------------------------------------------------------------------
class NetMF:
    def __init__(self, window_size, rank, embedding_dim, negative):
        self.window_size = window_size
        self.rank = rank
        self.embedding_dim = embedding_dim
        self.negative = negative
        # dummy_param in the torch module carries no values; nothing to init.

    def __call__(self, edge_index, num_nodes):
        n = num_nodes
        tile, n_pad = _choose_tile_and_pad(n)

        # --- Degrees + normalized adjacency directly from the edge list (O(E) scatters).
        # Duplicate-add semantics match the reference coo_matrix construction.
        e0 = edge_index[0].astype(jnp.int32)
        e1 = edge_index[1].astype(jnp.int32)
        ones = jnp.ones(e0.shape, jnp.float32)
        deg = jnp.zeros((n,), jnp.float32).at[e0].add(ones)        # row degrees
        vol = jnp.sum(deg)                                         # == A.sum()
        # Isolated nodes (deg == 0) -> dinv 0 (reference assumes none exist).
        dinv = jnp.where(deg > 0.0, jax.lax.rsqrt(jnp.maximum(deg, 1e-30)), 0.0)
        # S[i, j] = A[i, j] * dinv[i] * dinv[j]; assumes symmetric edge_index
        # (both directions present), same as the reference csgraph/eigsh path.
        s = jnp.zeros((n, n), jnp.float32).at[e0, e1].add(dinv[e0] * dinv[e1])

        # --- Top-`rank` eigenpairs of S (ascending -> take top slice).
        # TODO(synk): scipy.sparse.linalg.eigsh (Lanczos top-k, 'LA') has no Pallas
        # equivalent; dense jnp.linalg.eigh used.
        eigvals, eigvecs = jnp.linalg.eigh(s)
        eigvals = eigvals[-self.rank:]
        eigvecs = eigvecs[:, -self.rank:]

        # --- Eigenvalue filtering (tiny (rank,) vector; NaN-safe branch).
        w = self.window_size          # python int -> integer_pow handles negative eigvals
        lt1 = eigvals < 1.0
        denom = jnp.where(lt1, 1.0 - eigvals, 1.0)
        filt = jnp.where(lt1, eigvals * (1.0 - eigvals ** w) / denom / w, 1.0)
        filt = jnp.maximum(filt, 0.0).astype(jnp.float32)

        # --- V = D^{-1/2} U sqrt(filt) * sqrt(vol / negative), zero-padded lane-dense.
        scale = jnp.sqrt(vol / float(self.negative))
        v = eigvecs.astype(jnp.float32) * dinv[:, None] * jnp.sqrt(filt)[None, :] * scale
        r_pad = _round_up(max(self.rank, 1), 128)
        v_pad = jnp.zeros((n_pad, r_pad), jnp.float32).at[:n, :self.rank].set(v)

        # --- Pallas kernel: tiled DeepWalk matrix (padded rows are zero -> log(1)=0).
        m = deepwalk_matrix(v_pad, tile)[:n, :n]

        # --- Truncated factorization + embedding scaling.
        # M is exactly symmetric, so its SVD is its eigendecomposition up to column
        # signs: singular values = |lambda|, left singular vectors = eigenvectors.
        # TODO(synk): scipy.sparse.linalg.svds (truncated SVD) has no Pallas equivalent;
        # dense jnp.linalg.eigh (cheaper than dense SVD) with top-|lambda| selection used.
        evals_m, evecs_m = jnp.linalg.eigh(m)
        abs_l = jnp.abs(evals_m)
        order = jnp.argsort(abs_l)[::-1][:self.embedding_dim]      # top-|lambda|, descending
        u_top = evecs_m[:, order].astype(jnp.float32)
        s_top = abs_l[order].astype(jnp.float32)
        # (N, embedding_dim) scaling is launch-overhead dominated as a Pallas call;
        # plain jnp fuses into the surrounding XLA graph.
        return u_top * jnp.sqrt(s_top)[None, :]


# ----------------------------------------------------------------------------
# Example / smoke test
# ----------------------------------------------------------------------------
if __name__ == "__main__":
    num_nodes = 16
    window_size = 5
    rank = 8
    embedding_dim = 4
    negative = 1

    # Deterministic small graph: a ring (guarantees no isolated nodes) plus random
    # symmetric edges. edge_index shape: (2, 72).
    key = jax.random.PRNGKey(0)
    k1, k2 = jax.random.split(key)
    ring_src = jnp.arange(num_nodes, dtype=jnp.int32)
    ring_dst = (ring_src + 1) % num_nodes
    rnd_src = jax.random.randint(k1, (20,), 0, num_nodes, dtype=jnp.int32)
    rnd_dst = jax.random.randint(k2, (20,), 0, num_nodes, dtype=jnp.int32)
    e0 = jnp.concatenate([ring_src, ring_dst, rnd_src, rnd_dst])
    e1 = jnp.concatenate([ring_dst, ring_src, rnd_dst, rnd_src])
    edge_index = jnp.stack([e0, e1])

    model = NetMF(window_size=window_size, rank=rank,
                  embedding_dim=embedding_dim, negative=negative)
    embeddings = model(edge_index, num_nodes)
    embeddings = jax.block_until_ready(embeddings)

    assert embeddings.shape == (num_nodes, embedding_dim), embeddings.shape
    assert embeddings.dtype == jnp.float32
    assert bool(jnp.all(jnp.isfinite(embeddings)))
    print("KERNEL_OK")
</pallas_src>

<mosaic_0001>
module attributes {stable_mosaic.version = 11 : i64} {
  func.func @_deepwalk_kernel(%arg0: i32, %arg1: i32, %arg2: memref<128x128xf32, #tpu.memory_space<vmem>>, %arg3: memref<128x128xf32, #tpu.memory_space<vmem>>, %arg4: memref<128x128xf32, #tpu.memory_space<vmem>>) attributes {dimension_semantics = [#tpu.dimension_semantics<parallel>, #tpu.dimension_semantics<parallel>], iteration_bounds = array<i64: 1, 1>, scalar_prefetch = 0 : i64, scratch_operands = 0 : i64, tpu.core_type = #tpu.core_type<tc>, window_params = [{pipeline_mode = #tpu.pipeline_mode<synchronous>, transform_indices = @transform_0, window_bounds = array<i64: 128, 128>}, {pipeline_mode = #tpu.pipeline_mode<synchronous>, transform_indices = @transform_1, window_bounds = array<i64: 128, 128>}, {transform_indices = @transform_2, window_bounds = array<i64: 128, 128>}]} {
    %c128_i32 = arith.constant 128 : i32
    %0 = arith.muli %arg0, %c128_i32 : i32
    %1 = tpu.assume_multiple %0, 128 : i32
    %c128_i32_0 = arith.constant 128 : i32
    %2 = arith.muli %arg1, %c128_i32_0 : i32
    %3 = tpu.assume_multiple %2, 128 : i32
    %4 = arith.index_cast %1 : i32 to index
    %c0 = arith.constant 0 : index
    %5 = vector.load %arg2[%4, %c0] : memref<128x128xf32, #tpu.memory_space<vmem>>, vector<128x128xf32>
    %c0_1 = arith.constant 0 : index
    %6 = arith.index_cast %3 : i32 to index
    %7 = vector.load %arg3[%c0_1, %6] : memref<128x128xf32, #tpu.memory_space<vmem>>, vector<128x128xf32>
    %cst = arith.constant dense<0.000000e+00> : vector<128x128xf32>
    %8 = tpu.matmul %5, %7, %cst {dimension_numbers = #tpu.dot_dimension_numbers<[1], [0], [0], [1], [0, 0, 1, 1], [], []>} : vector<128x128xf32>, vector<128x128xf32>, vector<128x128xf32> -> vector<128x128xf32>
    %cst_2 = arith.constant 1.000000e+00 : f32
    %9 = vector.broadcast %cst_2 : f32 to vector<128x128xf32>
    %10 = arith.maximumf %8, %9 : vector<128x128xf32>
    %11 = math.log %10 : vector<128x128xf32>
    %c0_3 = arith.constant 0 : index
    %c0_4 = arith.constant 0 : index
    %12 = vector.load %arg4[%c0_3, %c0_4] : memref<128x128xf32, #tpu.memory_space<vmem>>, vector<128x128xf32>
    tpu.vector_store %arg4[%c0_3, %c0_4], %11 {strides = array<i32>} : memref<128x128xf32, #tpu.memory_space<vmem>>, vector<128x128xf32>,
    return
  }
  func.func @transform_0(%arg0: i32, %arg1: i32) -> (i32, i32) {
    %c0_i32 = arith.constant 0 : i32
    %c0_i32_0 = arith.constant 0 : i32
    %c0_i32_1 = arith.constant 0 : i32
    return %c0_i32, %c0_i32_0 : i32, i32
  }
  func.func @transform_1(%arg0: i32, %arg1: i32) -> (i32, i32) {
    %c0_i32 = arith.constant 0 : i32
    %c0_i32_0 = arith.constant 0 : i32
    %c0_i32_1 = arith.constant 0 : i32
    return %c0_i32, %c0_i32_0 : i32, i32
  }
  func.func @transform_2(%arg0: i32, %arg1: i32) -> (i32, i32) {
    %c0_i32 = arith.constant 0 : i32
    return %arg0, %arg1 : i32, i32
  }
}

</mosaic_0001>

<llo_original>
// kernel: tpu_custom_call.1
$region0: #{tpu_custom_call.1}
  #allocation0 [shape = 'u32[]', space=smem, size = 0x4, offset = 0x4, fixed_abs, tag = 'smem constant byte address 0x4 - core index']
  #allocation1 [shape = 'u32[144,128]{1,0:T(1,128)}', space=vmem, size = 0x12000, scoped, tag = 'internal scratch']
  %s0 = inlined_call_operand.hbm [shape: f32[128,128], index: 0, kind: input, shape index: {}]
  %s1 = inlined_call_operand.hbm [shape: f32[128,128], index: 1, kind: input, shape index: {}]
  %s2 = inlined_call_operand.hbm [shape: f32[128,128], index: 2, kind: output, shape index: {}]
  %s3 = sld [smem:[#allocation0]]
  $region26: #{tpu_custom_call.1} parent=0
    _
  %s5 = ssub.s32 1, %s3
  %s6 = scalar_select 0, %s5, %s3
  $region1: #{tpu_custom_call.1} parent=0
    #allocation2 [shape = 'u8[65536]{0}', space=vmem, size = 0x10000, scoped, tag = 'input window, operand 0, single buffered']
    #allocation3 [shape = 's32[1]{0}', space=sflag, size = 0x4, scoped, tag = 'scoped memory for tpu_custom_call.1']
    #allocation4 [shape = 's32[1]{0}', space=sflag, size = 0x4, scoped, tag = 'scoped memory for tpu_custom_call.1']
    #allocation5 [shape = 'u8[65536]{0}', space=vmem, size = 0x10000, scoped, tag = 'input window, operand 1, single buffered']
    #allocation6 [shape = 's32[1]{0}', space=sflag, size = 0x4, scoped, tag = 'scoped memory for tpu_custom_call.1']
    #allocation7 [shape = 'u8[65536]{0}', space=vmem, size = 0x10000, scoped, tag = 'output window, operand 0, single buffered']
    %7 = vsyncpa [#allocation3], 0
    %8 = vsyncpa [#allocation6], 0
    %9 = vsyncpa [#allocation4], 0
    // Predicated region
    $region2: #{tpu_custom_call.1} parent=1 // pred_check
      _
    $region3: #{tpu_custom_call.1} parent=1 // pred_check_branch
      %11 = sbr.rel (0) target = $region5
    $region4: #{tpu_custom_call.1} parent=1 // pred_region
      %s13 = ssub.s32 2048, 2048
      %14 = vsyncadd [#allocation3], %s13
      %s15 = sshll.u32 [#allocation2], 4
      %s16 = int_to_ptr.vmem [resolvable:$true] %s15
      %21 = dma.hbm_to_vmem [thread:$0]  %s0, 2048, %s16, [#allocation3], 128, 128, 8
    $region5: #{tpu_custom_call.1} parent=1 // pred_fallthru
      _
    // Predicated region
    $region6: #{tpu_custom_call.1} parent=1 // pred_check
      _
    $region7: #{tpu_custom_call.1} parent=1 // pred_check_branch
      %23 = sbr.rel (0) target = $region9
    $region8: #{tpu_custom_call.1} parent=1 // pred_region
      %s25 = ssub.s32 2048, 2048
      %26 = vsyncadd [#allocation6], %s25
      %s27 = sshll.u32 [#allocation5], 4
      %s28 = int_to_ptr.vmem [resolvable:$true] %s27
      %33 = dma.hbm_to_vmem [thread:$0]  %s1, 2048, %s28, [#allocation6], 128, 128, 8
    $region9: #{tpu_custom_call.1} parent=1 // pred_fallthru
      _
    // Predicated region
    $region10: #{tpu_custom_call.1} parent=1 // pred_check
      _
    $region11: #{tpu_custom_call.1} parent=1 // pred_check_branch
      %35 = sbr.rel (0) target = $region13
    $region12: #{tpu_custom_call.1} parent=1 // pred_region
      %36 = dma.done [#allocation3], 2048
    $region13: #{tpu_custom_call.1} parent=1 // pred_fallthru
      _
    // Predicated region
    $region14: #{tpu_custom_call.1} parent=1 // pred_check
      _
    $region15: #{tpu_custom_call.1} parent=1 // pred_check_branch
      %38 = sbr.rel (0) target = $region17
    $region16: #{tpu_custom_call.1} parent=1 // pred_region
      %39 = dma.done [#allocation6], 2048
    $region17: #{tpu_custom_call.1} parent=1 // pred_fallthru
      _
    %s40 = smul.u32 0, 128
    %s41 = smul.u32 0, 128
    %s42 = scalar_lea.vmem [#allocation2], %s40
    %v43 = vld [vmem:[%s42] sm:$0xff]
    %v44 = vld [vmem:[%s42 + $0x8] sm:$0xff]
    %v45 = vld [vmem:[%s42 + $0x10] sm:$0xff]
    %v46 = vld [vmem:[%s42 + $0x18] sm:$0xff]
    %v47 = vld [vmem:[%s42 + $0x20] sm:$0xff]
    %v48 = vld [vmem:[%s42 + $0x28] sm:$0xff]
    %v49 = vld [vmem:[%s42 + $0x30] sm:$0xff]
    %v50 = vld [vmem:[%s42 + $0x38] sm:$0xff]
    %v51 = vld [vmem:[%s42 + $0x40] sm:$0xff]
    %v52 = vld [vmem:[%s42 + $0x48] sm:$0xff]
    %v53 = vld [vmem:[%s42 + $0x50] sm:$0xff]
    %v54 = vld [vmem:[%s42 + $0x58] sm:$0xff]
    %v55 = vld [vmem:[%s42 + $0x60] sm:$0xff]
    %v56 = vld [vmem:[%s42 + $0x68] sm:$0xff]
    %v57 = vld [vmem:[%s42 + $0x70] sm:$0xff]
    %v58 = vld [vmem:[%s42 + $0x78] sm:$0xff]
    %s59 = sshra.s32 %s41, 7
    %s60 = sand.u32 %s41, 127
    %s61 = scalar_lea.vmem [#allocation5], %s59
    %v62 = vld [vmem:[%s61] sm:$0xff]
    %v63 = vld [vmem:[%s61 + $0x8] sm:$0xff]
    %v64 = vld [vmem:[%s61 + $0x10] sm:$0xff]
    %v65 = vld [vmem:[%s61 + $0x18] sm:$0xff]
    %v66 = vld [vmem:[%s61 + $0x20] sm:$0xff]
    %v67 = vld [vmem:[%s61 + $0x28] sm:$0xff]
    %v68 = vld [vmem:[%s61 + $0x30] sm:$0xff]
    %v69 = vld [vmem:[%s61 + $0x38] sm:$0xff]
    %v70 = vld [vmem:[%s61 + $0x40] sm:$0xff]
    %v71 = vld [vmem:[%s61 + $0x48] sm:$0xff]
    %v72 = vld [vmem:[%s61 + $0x50] sm:$0xff]
    %v73 = vld [vmem:[%s61 + $0x58] sm:$0xff]
    %v74 = vld [vmem:[%s61 + $0x60] sm:$0xff]
    %v75 = vld [vmem:[%s61 + $0x68] sm:$0xff]
    %v76 = vld [vmem:[%s61 + $0x70] sm:$0xff]
    %v77 = vld [vmem:[%s61 + $0x78] sm:$0xff]
    %78 = vmatprep.subr.mxu0 0.0
    %79 = vmatpush1.msra.mxu0 %v77
    %80 = vmatprep.subr.mxu0 0.0
    %81 = vmatpush1.msra.mxu0 %v76
    %82 = vmatprep.subr.mxu0 0.0
    %83 = vmatpush1.msra.mxu0 %v75
    %84 = vmatprep.subr.mxu0 0.0
    %85 = vmatpush1.msra.mxu0 %v74
    %86 = vmatprep.subr.mxu0 0.0
    %87 = vmatpush1.msra.mxu0 %v73
    %88 = vmatprep.subr.mxu0 0.0
    %89 = vmatpush1.msra.mxu0 %v72
    %90 = vmatprep.subr.mxu0 0.0
    %91 = vmatpush1.msra.mxu0 %v71
    %92 = vmatprep.subr.mxu0 0.0
    %93 = vmatpush1.msra.mxu0 %v70
    %94 = vmatprep.subr.mxu0 0.0
    %95 = vmatpush1.msra.mxu0 %v69
    %96 = vmatprep.subr.mxu0 0.0
    %97 = vmatpush1.msra.mxu0 %v68
    %98 = vmatprep.subr.mxu0 0.0
    %99 = vmatpush1.msra.mxu0 %v67
    %100 = vmatprep.subr.mxu0 0.0
    %101 = vmatpush1.msra.mxu0 %v66
    %102 = vmatprep.subr.mxu0 0.0
    %103 = vmatpush1.msra.mxu0 %v65
    %104 = vmatprep.subr.mxu0 0.0
    %105 = vmatpush1.msra.mxu0 %v64
    %106 = vmatprep.subr.mxu0 0.0
    %107 = vmatpush1.msra.mxu0 %v63
    %108 = vmatprep.subr.mxu0 0.0
    %109 = vmatpush1.msra.mxu0 %v62
    %110 = vmatprep.subr.mxu0 0.0
    %111 = vmatpush2.msra.mxu0 0.0
    %112 = vmatprep.subr.mxu0 0.0
    %113 = vmatpush2.msra.mxu0 0.0
    %114 = vmatprep.subr.mxu0 0.0
    %115 = vmatpush2.msra.mxu0 0.0
    %116 = vmatprep.subr.mxu0 0.0
    %117 = vmatpush2.msra.mxu0 0.0
    %118 = vmatprep.subr.mxu0 0.0
    %119 = vmatpush2.msra.mxu0 0.0
    %120 = vmatprep.subr.mxu0 0.0
    %121 = vmatpush2.msra.mxu0 0.0
    %122 = vmatprep.subr.mxu0 0.0
    %123 = vmatpush2.msra.mxu0 0.0
    %124 = vmatprep.subr.mxu0 0.0
    %125 = vmatpush2.msra.mxu0 0.0
    %126 = vmatprep.subr.mxu0 0.0
    %127 = vmatpush2.msra.mxu0 0.0
    %128 = vmatprep.subr.mxu0 0.0
    %129 = vmatpush2.msra.mxu0 0.0
    %130 = vmatprep.subr.mxu0 0.0
    %131 = vmatpush2.msra.mxu0 0.0
    %132 = vmatprep.subr.mxu0 0.0
    %133 = vmatpush2.msra.mxu0 0.0
    %134 = vmatprep.subr.mxu0 0.0
    %135 = vmatpush2.msra.mxu0 0.0
    %136 = vmatprep.subr.mxu0 0.0
    %137 = vmatpush2.msra.mxu0 0.0
    %138 = vmatprep.subr.mxu0 0.0
    %139 = vmatpush2.msra.mxu0 0.0
    %140 = vmatprep.subr.mxu0 0.0
    %141 = vmatpush2.msra.mxu0 0.0
    %142 = vmatprep.mubr.f32.mxu0 0.0
    %143 = vmatmul.mubr.f32.gmra.mxu0 %v43
    %v144 = vpop.f32.mrf.mxu0
    %v145 = vadd.f32 0.0, %v144
    %v146 = vpop.f32.mrf.mxu0
    %147 = vmatprep.mubr.f32.mxu0 0.0
    %148 = vmatmul.mubr.f32.gmra.mxu0 %v44
    %v149 = vpop.f32.mrf.mxu0
    %v150 = vadd.f32 0.0, %v149
    %v151 = vpop.f32.mrf.mxu0
    %152 = vmatprep.mubr.f32.mxu0 0.0
    %153 = vmatmul.mubr.f32.gmra.mxu0 %v45
    %v154 = vpop.f32.mrf.mxu0
    %v155 = vadd.f32 0.0, %v154
    %v156 = vpop.f32.mrf.mxu0
    %157 = vmatprep.mubr.f32.mxu0 0.0
    %158 = vmatmul.mubr.f32.gmra.mxu0 %v46
    %v159 = vpop.f32.mrf.mxu0
    %v160 = vadd.f32 0.0, %v159
    %v161 = vpop.f32.mrf.mxu0
    %162 = vmatprep.mubr.f32.mxu0 0.0
    %163 = vmatmul.mubr.f32.gmra.mxu0 %v47
    %v164 = vpop.f32.mrf.mxu0
    %v165 = vadd.f32 0.0, %v164
    %v166 = vpop.f32.mrf.mxu0
    %167 = vmatprep.mubr.f32.mxu0 0.0
    %168 = vmatmul.mubr.f32.gmra.mxu0 %v48
    %v169 = vpop.f32.mrf.mxu0
    %v170 = vadd.f32 0.0, %v169
    %v171 = vpop.f32.mrf.mxu0
    %172 = vmatprep.mubr.f32.mxu0 0.0
    %173 = vmatmul.mubr.f32.gmra.mxu0 %v49
    %v174 = vpop.f32.mrf.mxu0
    %v175 = vadd.f32 0.0, %v174
    %v176 = vpop.f32.mrf.mxu0
    %177 = vmatprep.mubr.f32.mxu0 0.0
    %178 = vmatmul.mubr.f32.gmra.mxu0 %v50
    %v179 = vpop.f32.mrf.mxu0
    %v180 = vadd.f32 0.0, %v179
    %v181 = vpop.f32.mrf.mxu0
    %182 = vmatprep.mubr.f32.mxu0 0.0
    %183 = vmatmul.mubr.f32.gmra.mxu0 %v51
    %v184 = vpop.f32.mrf.mxu0
    %v185 = vadd.f32 0.0, %v184
    %v186 = vpop.f32.mrf.mxu0
    %187 = vmatprep.mubr.f32.mxu0 0.0
    %188 = vmatmul.mubr.f32.gmra.mxu0 %v52
    %v189 = vpop.f32.mrf.mxu0
    %v190 = vadd.f32 0.0, %v189
    %v191 = vpop.f32.mrf.mxu0
    %192 = vmatprep.mubr.f32.mxu0 0.0
    %193 = vmatmul.mubr.f32.gmra.mxu0 %v53
    %v194 = vpop.f32.mrf.mxu0
    %v195 = vadd.f32 0.0, %v194
    %v196 = vpop.f32.mrf.mxu0
    %197 = vmatprep.mubr.f32.mxu0 0.0
    %198 = vmatmul.mubr.f32.gmra.mxu0 %v54
    %v199 = vpop.f32.mrf.mxu0
    %v200 = vadd.f32 0.0, %v199
    %v201 = vpop.f32.mrf.mxu0
    %202 = vmatprep.mubr.f32.mxu0 0.0
    %203 = vmatmul.mubr.f32.gmra.mxu0 %v55
    %v204 = vpop.f32.mrf.mxu0
    %v205 = vadd.f32 0.0, %v204
    %v206 = vpop.f32.mrf.mxu0
    %207 = vmatprep.mubr.f32.mxu0 0.0
    %208 = vmatmul.mubr.f32.gmra.mxu0 %v56
    %v209 = vpop.f32.mrf.mxu0
    %v210 = vadd.f32 0.0, %v209
    %v211 = vpop.f32.mrf.mxu0
    %212 = vmatprep.mubr.f32.mxu0 0.0
    %213 = vmatmul.mubr.f32.gmra.mxu0 %v57
    %v214 = vpop.f32.mrf.mxu0
    %v215 = vadd.f32 0.0, %v214
    %v216 = vpop.f32.mrf.mxu0
    %217 = vmatprep.mubr.f32.mxu0 0.0
    %218 = vmatmul.mubr.f32.gmra.mxu0 %v58
    %v219 = vpop.f32.mrf.mxu0
    %v220 = vadd.f32 0.0, %v219
    %v221 = vpop.f32.mrf.mxu0
    %222 = vdwg.mxu0
    %v223 = vmax.f32 %v145, 1.0
    %v224 = vmax.f32 %v150, 1.0
    %v225 = vmax.f32 %v155, 1.0
    %v226 = vmax.f32 %v160, 1.0
    %v227 = vmax.f32 %v165, 1.0
    %v228 = vmax.f32 %v170, 1.0
    %v229 = vmax.f32 %v175, 1.0
    %v230 = vmax.f32 %v180, 1.0
    %v231 = vmax.f32 %v185, 1.0
    %v232 = vmax.f32 %v190, 1.0
    %v233 = vmax.f32 %v195, 1.0
    %v234 = vmax.f32 %v200, 1.0
    %v235 = vmax.f32 %v205, 1.0
    %v236 = vmax.f32 %v210, 1.0
    %v237 = vmax.f32 %v215, 1.0
    %v238 = vmax.f32 %v220, 1.0
    %v239 = vlog2.pop %v223
    %v240 = vmul.f32 %v239, 0.6931472
    %v241 = vlog2.pop %v224
    %v242 = vmul.f32 %v241, 0.6931472
    %v243 = vlog2.pop %v225
    %v244 = vmul.f32 %v243, 0.6931472
    %v245 = vlog2.pop %v226
    %v246 = vmul.f32 %v245, 0.6931472
    %v247 = vlog2.pop %v227
    %v248 = vmul.f32 %v247, 0.6931472
    %v249 = vlog2.pop %v228
    %v250 = vmul.f32 %v249, 0.6931472
    %v251 = vlog2.pop %v229
    %v252 = vmul.f32 %v251, 0.6931472
    %v253 = vlog2.pop %v230
    %v254 = vmul.f32 %v253, 0.6931472
    %v255 = vlog2.pop %v231
    %v256 = vmul.f32 %v255, 0.6931472
    %v257 = vlog2.pop %v232
    %v258 = vmul.f32 %v257, 0.6931472
    %v259 = vlog2.pop %v233
    %v260 = vmul.f32 %v259, 0.6931472
    %v261 = vlog2.pop %v234
    %v262 = vmul.f32 %v261, 0.6931472
    %v263 = vlog2.pop %v235
    %v264 = vmul.f32 %v263, 0.6931472
    %v265 = vlog2.pop %v236
    %v266 = vmul.f32 %v265, 0.6931472
    %v267 = vlog2.pop %v237
    %v268 = vmul.f32 %v267, 0.6931472
    %v269 = vlog2.pop %v238
    %v270 = vmul.f32 %v269, 0.6931472
    %271 = vst [vmem:[#allocation7] sm:$0xff] %v240
    %272 = vst [vmem:[#allocation7 + $0x8] sm:$0xff] %v242
    %273 = vst [vmem:[#allocation7 + $0x10] sm:$0xff] %v244
    %274 = vst [vmem:[#allocation7 + $0x18] sm:$0xff] %v246
    %275 = vst [vmem:[#allocation7 + $0x20] sm:$0xff] %v248
    %276 = vst [vmem:[#allocation7 + $0x28] sm:$0xff] %v250
    %277 = vst [vmem:[#allocation7 + $0x30] sm:$0xff] %v252
    %278 = vst [vmem:[#allocation7 + $0x38] sm:$0xff] %v254
    %279 = vst [vmem:[#allocation7 + $0x40] sm:$0xff] %v256
    %280 = vst [vmem:[#allocation7 + $0x48] sm:$0xff] %v258
    %281 = vst [vmem:[#allocation7 + $0x50] sm:$0xff] %v260
    %282 = vst [vmem:[#allocation7 + $0x58] sm:$0xff] %v262
    %283 = vst [vmem:[#allocation7 + $0x60] sm:$0xff] %v264
    %284 = vst [vmem:[#allocation7 + $0x68] sm:$0xff] %v266
    %285 = vst [vmem:[#allocation7 + $0x70] sm:$0xff] %v268
    %286 = vst [vmem:[#allocation7 + $0x78] sm:$0xff] %v270
    // Predicated region
    $region18: #{tpu_custom_call.1} parent=1 // pred_check
      _
    $region19: #{tpu_custom_call.1} parent=1 // pred_check_branch
      %288 = sbr.rel (0) target = $region21
    $region20: #{tpu_custom_call.1} parent=1 // pred_region
      %s290 = ssub.s32 2048, 2048
      %291 = vsyncadd [#allocation4], %s290
      %s292 = sshll.u32 [#allocation7], 4
      %s293 = int_to_ptr.vmem [resolvable:$true] %s292
      %298 = dma.vmem_to_hbm [thread:$0]  %s293, 2048, %s2, [#allocation4], 128, 128, 8
    $region21: #{tpu_custom_call.1} parent=1 // pred_fallthru
      _
    // Predicated region
    $region22: #{tpu_custom_call.1} parent=1 // pred_check
      _
    $region23: #{tpu_custom_call.1} parent=1 // pred_check_branch
      %300 = sbr.rel (0) target = $region25
    $region24: #{tpu_custom_call.1} parent=1 // pred_region
      %301 = dma.done [#allocation4], 2048
    $region25: #{tpu_custom_call.1} parent=1 // pred_fallthru
      _
    %302 = vsyncpa [#allocation3], 1
    %303 = vsyncpa [#allocation6], 1
    %304 = vsyncpa [#allocation4], 1

</llo_original>
